<compile_context>
chip_gen: v6e
topology: v6e:2x2x1
jax: 0.10.0
libtpu: 0.0.40
codegen_flags: <defaults>
</compile_context>

<pallas_src>
import functools
import math

import jax
import jax.numpy as jnp
import numpy as np
from jax.experimental import pallas as pl
from jax.experimental.pallas import tpu as pltpu


# ----------------------------------------------------------------------------- prior weights
def build_prior(group: int) -> np.ndarray:
    """Deterministic prior tensor, shape (group, 3, 3) (squeezed from (group,1,3,3))."""
    prior = np.zeros((group, 3, 3), dtype=np.float32)
    half_g = group // 2
    for i in range(group):
        for h in range(3):
            for w in range(3):
                if i < half_g:
                    prior[i, h, w] = math.cos(math.pi * (h + 0.5) * (i + 1) / 3)
                else:
                    prior[i, h, w] = math.cos(math.pi * (w + 0.5) * (i + 1 - half_g) / 3)
    return prior


def _channel_weights(channels: int, width: int) -> np.ndarray:
    """Per-channel 3x3 taps, shape (C, 3, 3); channel ci uses prior[ci % group]."""
    group = channels // width
    prior = build_prior(group)                  # (group, 3, 3)
    return np.tile(prior, (width, 1, 1))        # (C, 3, 3)


# ----------------------------------------------------------------------------- fast kernel (stride == 1)
def _priorfilter_tiled_kernel(x_ref, w_ref, o_ref, *, TH, C, OL):
    # x_ref: (1, TH+2, WPL)  haloed input slab for this (batch, H-tile) grid step.
    # w_ref: (9, OL)         per-output-lane taps (tap = dh*3 + dw), resident.
    # o_ref: (1, TH, OL)     lane-dense output tile (OL is a multiple of 128).
    acc = jnp.zeros((TH, OL), jnp.float32)
    for dh in range(3):                                         # sublane-offset bands
        for dw in range(3):                                     # lane-offset bands
            band = x_ref[0, dh:dh + TH, dw * C:dw * C + OL].astype(jnp.float32)
            acc = acc + band * w_ref[dh * 3 + dw:dh * 3 + dw + 1, :]
    o_ref[0] = acc.astype(o_ref.dtype)


def _choose_tile_h(h_out, batch, in_row_bytes, out_row_bytes, acc_row_bytes,
                   vmem_budget, target_steps=4):
    # Output blocks need a sublane dim that is a multiple of 8 (or the full extent).
    cand = [d for d in range(8, h_out + 1, 8) if h_out % d == 0]
    if h_out not in cand:
        cand.append(h_out)

    def working_set(th):
        # double-buffered haloed input slab (sublane-padded) + double-buffered output tile
        # + one f32 accumulator worth of temps.
        return 2 * (th + 8) * in_row_bytes + 2 * th * out_row_bytes + th * acc_row_bytes

    fit = [d for d in cand if working_set(d) <= vmem_budget] or [min(cand)]
    # Prefer enough grid steps for pipelining / two TensorCores, then the biggest tile.
    enough = [d for d in fit if batch * (h_out // d) >= target_steps] or fit
    return max(enough)


def _prior_filter_stride1(x_nchw, *, padding, width):
    b, c, h, w = x_nchw.shape
    ch_w = _channel_weights(c, width)                                 # (C, 3, 3)

    h_pad, w_pad = h + 2 * padding, w + 2 * padding
    h_out, w_out = h_pad - 2, w_pad - 2
    itemsize = x_nchw.dtype.itemsize

    ol = w_out * c
    ol_pad = max(128, -(-ol // 128) * 128)        # lane-dense output width (multiple of 128)
    wpl = w_pad * c
    wpl_pad = max(wpl, ol_pad + 2 * c)            # enough input lanes for the dw=2 band

    # Per-output-lane taps: lane j = wo*C + ci uses ch_w[ci, dh, dw]; padded tail lanes get
    # zero weight so the extra output lanes are exact zeros (dropped in the wrapper).
    w_rows = np.zeros((9, ol_pad), np.float32)
    for dh in range(3):
        for dw in range(3):
            w_rows[dh * 3 + dw, :ol] = np.tile(ch_w[:, dh, dw], w_out)
    w_rows = jnp.asarray(w_rows)

    # Chip-aware VMEM budget (v5e/v6e 128 MiB, v7x 64 MiB) for the tile choice + limit.
    try:
        vmem_cap = int(pltpu.get_tpu_info().vmem_capacity_bytes)
    except Exception:  # noqa: BLE001 - be conservative if the query is unavailable
        vmem_cap = 64 * 1024 * 1024

    th = _choose_tile_h(h_out, b,
                        in_row_bytes=wpl_pad * itemsize,
                        out_row_bytes=ol_pad * itemsize,
                        acc_row_bytes=ol_pad * 4,
                        vmem_budget=int(vmem_cap * 0.35))
    n_ht = h_out // th

    # NCHW -> zero-padded channels-last -> (B, H_pad, W_pad*C) lane fold (tail-padded to
    # wpl_pad) -> haloed per-tile slabs (B*n_ht, TH+2, wpl_pad).  The halo duplication is
    # only 2/TH rows and lets the kernel input block scale with TH instead of H.
    x_nhwc = jnp.transpose(x_nchw, (0, 2, 3, 1))
    x_pad = jnp.pad(x_nhwc, ((0, 0), (padding, padding), (padding, padding), (0, 0)))
    x_fold = x_pad.reshape(b, h_pad, wpl)
    if wpl_pad > wpl:
        x_fold = jnp.pad(x_fold, ((0, 0), (0, 0), (0, wpl_pad - wpl)))
    row_idx = np.arange(n_ht)[:, None] * th + np.arange(th + 2)[None, :]   # (n_ht, TH+2)
    x_tiles = x_fold[:, row_idx, :].reshape(b * n_ht, th + 2, wpl_pad)

    kernel = functools.partial(_priorfilter_tiled_kernel, TH=th, C=c, OL=ol_pad)

    cost = pl.CostEstimate(
        flops=2 * 9 * b * h_out * w_out * c,
        transcendentals=0,
        bytes_accessed=(b * n_ht * (th + 2) * wpl_pad + b * h_out * ol_pad) * itemsize
                       + 9 * ol_pad * 4,
    )

    # Always set the scoped-VMEM limit explicitly (v5e default is only 16 MiB) and clamp
    # it to 3/4 of the actual chip's physical VMEM (v7x is 64 MiB, not 128).
    est_vmem = (2 * (th + 8) * wpl_pad + 2 * th * ol_pad) * itemsize \
               + th * ol_pad * 4 + 2 * 16 * ol_pad * 4
    vmem_limit = int(min(vmem_cap * 3 // 4,
                         max(2 * est_vmem + (1 << 20), 32 * 1024 * 1024)))

    out_fold = pl.pallas_call(
        kernel,
        out_shape=jax.ShapeDtypeStruct((b, h_out, ol_pad), x_nchw.dtype),
        grid_spec=pltpu.PrefetchScalarGridSpec(
            num_scalar_prefetch=0,
            grid=(b, n_ht),
            in_specs=[
                # Haloed slab per (batch, H-tile): O(TH) rows, auto double-buffered.
                pl.BlockSpec((1, th + 2, wpl_pad), lambda bi, hi: (bi * n_ht + hi, 0, 0)),
                # Tap weights: resident (block index never changes -> DMA'd once).
                pl.BlockSpec((9, ol_pad), lambda bi, hi: (0, 0)),
            ],
            out_specs=pl.BlockSpec((1, th, ol_pad), lambda bi, hi: (bi, hi, 0)),
        ),
        compiler_params=pltpu.CompilerParams(
            dimension_semantics=("parallel", "parallel"),
            vmem_limit_bytes=vmem_limit),
        cost_estimate=cost,
    )(x_tiles, w_rows)

    # (B, H_out, OL_pad) -> drop pad lanes -> (B, C, H_out, W_out)
    out = out_fold[:, :, :ol].reshape(b, h_out, w_out, c)
    return jnp.transpose(out, (0, 3, 1, 2))


# ----------------------------------------------------------------------------- generic fallback (stride > 1)
def _priorfilter_nhwc_kernel(x_ref, w_ref, o_ref, *, stride, H_out, W_out):
    # Simple correct fallback: NHWC whole-image block, C on lanes.
    x = x_ref[0]                     # (H_pad, W_pad, C)
    w = w_ref[...]                   # (9, C)
    C = x.shape[-1]
    acc = jnp.zeros((H_out, W_out, C), jnp.float32)
    for dh in range(3):
        for dw in range(3):
            patch = jax.lax.slice(
                x, (dh, dw, 0),
                (dh + stride * (H_out - 1) + 1, dw + stride * (W_out - 1) + 1, C),
                (stride, stride, 1))
            acc = acc + patch.astype(jnp.float32) * w[dh * 3 + dw][None, None, :]
    o_ref[0] = acc.astype(o_ref.dtype)


def _prior_filter_generic(x_nchw, *, stride, padding, width):
    # TODO(synk): the stride>1 fallback keeps C(<128) on the lane axis and a whole-image
    # block per batch element; apply the (W,C) lane fold + H tiling here too if stride>1
    # ever becomes a hot path.
    b, c, h, w = x_nchw.shape
    ch_w = _channel_weights(c, width)                                       # (C, 3, 3)
    w_flat = jnp.asarray(np.transpose(ch_w, (1, 2, 0)).reshape(9, c))       # (9, C)

    x_nhwc = jnp.transpose(x_nchw, (0, 2, 3, 1))
    x_pad = jnp.pad(x_nhwc, ((0, 0), (padding, padding), (padding, padding), (0, 0)))
    h_pad, w_pad = h + 2 * padding, w + 2 * padding
    h_out = (h_pad - 3) // stride + 1
    w_out = (w_pad - 3) // stride + 1

    kernel = functools.partial(_priorfilter_nhwc_kernel, stride=stride, H_out=h_out, W_out=w_out)
    out_nhwc = pl.pallas_call(
        kernel,
        out_shape=jax.ShapeDtypeStruct((b, h_out, w_out, c), x_nchw.dtype),
        grid_spec=pltpu.PrefetchScalarGridSpec(
            num_scalar_prefetch=0,
            grid=(b,),
            in_specs=[
                pl.BlockSpec((1, h_pad, w_pad, c), lambda bi: (bi, 0, 0, 0)),
                pl.BlockSpec((9, c), lambda bi: (0, 0)),
            ],
            out_specs=pl.BlockSpec((1, h_out, w_out, c), lambda bi: (bi, 0, 0, 0)),
        ),
        compiler_params=pltpu.CompilerParams(dimension_semantics=("parallel",)),
    )(x_pad, w_flat)
    return jnp.transpose(out_nhwc, (0, 3, 1, 2))


# ----------------------------------------------------------------------------- public entry
def prior_filter(x_nchw, *, stride, padding, width=4):
    b, c, h, w = x_nchw.shape
    assert c % width == 0
    if stride == 1:
        return _prior_filter_stride1(x_nchw, padding=padding, width=width)
    return _prior_filter_generic(x_nchw, stride=stride, padding=padding, width=width)


# ----------------------------------------------------------------------------- numpy reference
def ref_prior_filter_np(x, prior, stride, padding):
    b, c, h, w = x.shape
    group = prior.shape[0]
    xp = np.pad(x, ((0, 0), (0, 0), (padding, padding), (padding, padding)))
    H_out = (h + 2 * padding - 3) // stride + 1
    W_out = (w + 2 * padding - 3) // stride + 1
    out = np.zeros((b, c, H_out, W_out), np.float32)
    for bi in range(b):
        for ci in range(c):
            g = ci % group
            for ho in range(H_out):
                for wo in range(W_out):
                    patch = xp[bi, ci, ho * stride:ho * stride + 3, wo * stride:wo * stride + 3]
                    out[bi, ci, ho, wo] = np.sum(patch * prior[g])
    return out


# ----------------------------------------------------------------------------- main
if __name__ == "__main__":
    # primary config (channels divisible by width=4); W_out*C is naturally 128-aligned and
    # the output is split into 2 H-tiles per image -> exercises the haloed-tile path.
    B, C, H, W = 2, 8, 16, 16
    STRIDE, PADDING, WIDTH = 1, 1, 4

    key = jax.random.PRNGKey(0)
    x = jax.random.normal(key, (B, C, H, W), dtype=jnp.float32)

    out = jax.block_until_ready(prior_filter(x, stride=STRIDE, padding=PADDING, width=WIDTH))
    ref = ref_prior_filter_np(np.asarray(x), build_prior(C // WIDTH), STRIDE, PADDING)
    assert out.shape == (B, C, H // STRIDE, W // STRIDE), out.shape
    np.testing.assert_allclose(np.asarray(out), ref, atol=1e-4, rtol=1e-4)

    # secondary config: exercises the lane padding (W_out*C=40 -> 128) and a full-extent,
    # non-multiple-of-8 H tile.
    B2, C2, H2, W2 = 1, 4, 9, 10
    x2 = jax.random.normal(jax.random.PRNGKey(0), (B2, C2, H2, W2), dtype=jnp.float32)
    out2 = jax.block_until_ready(prior_filter(x2, stride=1, padding=1, width=4))
    ref2 = ref_prior_filter_np(np.asarray(x2), build_prior(C2 // 4), 1, 1)
    assert out2.shape == (B2, C2, H2, W2), out2.shape
    np.testing.assert_allclose(np.asarray(out2), ref2, atol=1e-4, rtol=1e-4)

    print("KERNEL_OK")
</pallas_src>

<mosaic_0001>
module attributes {stable_mosaic.version = 11 : i64} {
  func.func @_priorfilter_tiled_kernel(%arg0: i32, %arg1: i32, %arg2: memref<1x10x144xf32, #tpu.memory_space<vmem>>, %arg3: memref<9x128xf32, #tpu.memory_space<vmem>>, %arg4: memref<1x8x128xf32, #tpu.memory_space<vmem>>) attributes {dimension_semantics = [#tpu.dimension_semantics<parallel>, #tpu.dimension_semantics<parallel>], iteration_bounds = array<i64: 2, 2>, scalar_prefetch = 0 : i64, scratch_operands = 0 : i64, tpu.core_type = #tpu.core_type<tc>, window_params = [{transform_indices = @transform_0, window_bounds = array<i64: 1, 10, 144>}, {pipeline_mode = #tpu.pipeline_mode<synchronous>, transform_indices = @transform_1, window_bounds = array<i64: 9, 128>}, {transform_indices = @transform_2, window_bounds = array<i64: 1, 8, 128>}]} {
    %cst = arith.constant 0.000000e+00 : f32
    %0 = vector.broadcast %cst : f32 to vector<8x128xf32>
    %c0 = arith.constant 0 : index
    %c0_0 = arith.constant 0 : index
    %c0_1 = arith.constant 0 : index
    %1 = vector.load %arg2[%c0, %c0_0, %c0_1] : memref<1x10x144xf32, #tpu.memory_space<vmem>>, vector<1x8x128xf32>
    %2 = vector.shape_cast %1 : vector<1x8x128xf32> to vector<8x128xf32>
    %c0_2 = arith.constant 0 : index
    %c0_3 = arith.constant 0 : index
    %3 = vector.load %arg3[%c0_2, %c0_3] : memref<9x128xf32, #tpu.memory_space<vmem>>, vector<1x128xf32>
    %4 = vector.broadcast %3 : vector<1x128xf32> to vector<8x128xf32>
    %5 = arith.mulf %2, %4 : vector<8x128xf32>
    %6 = arith.addf %0, %5 : vector<8x128xf32>
    %c0_4 = arith.constant 0 : index
    %c0_5 = arith.constant 0 : index
    %c8 = arith.constant 8 : index
    %7 = vector.load %arg2[%c0_4, %c0_5, %c8] : memref<1x10x144xf32, #tpu.memory_space<vmem>>, vector<1x8x128xf32>
    %8 = vector.shape_cast %7 : vector<1x8x128xf32> to vector<8x128xf32>
    %c1 = arith.constant 1 : index
    %c0_6 = arith.constant 0 : index
    %9 = vector.load %arg3[%c1, %c0_6] : memref<9x128xf32, #tpu.memory_space<vmem>>, vector<1x128xf32>
    %10 = vector.broadcast %9 : vector<1x128xf32> to vector<8x128xf32>
    %11 = arith.mulf %8, %10 : vector<8x128xf32>
    %12 = arith.addf %6, %11 : vector<8x128xf32>
    %c0_7 = arith.constant 0 : index
    %c0_8 = arith.constant 0 : index
    %c16 = arith.constant 16 : index
    %13 = vector.load %arg2[%c0_7, %c0_8, %c16] : memref<1x10x144xf32, #tpu.memory_space<vmem>>, vector<1x8x128xf32>
    %14 = vector.shape_cast %13 : vector<1x8x128xf32> to vector<8x128xf32>
    %c2 = arith.constant 2 : index
    %c0_9 = arith.constant 0 : index
    %15 = vector.load %arg3[%c2, %c0_9] : memref<9x128xf32, #tpu.memory_space<vmem>>, vector<1x128xf32>
    %16 = vector.broadcast %15 : vector<1x128xf32> to vector<8x128xf32>
    %17 = arith.mulf %14, %16 : vector<8x128xf32>
    %18 = arith.addf %12, %17 : vector<8x128xf32>
    %c0_10 = arith.constant 0 : index
    %c1_11 = arith.constant 1 : index
    %c0_12 = arith.constant 0 : index
    %19 = vector.load %arg2[%c0_10, %c1_11, %c0_12] : memref<1x10x144xf32, #tpu.memory_space<vmem>>, vector<1x8x128xf32>
    %20 = vector.shape_cast %19 : vector<1x8x128xf32> to vector<8x128xf32>
    %c3 = arith.constant 3 : index
    %c0_13 = arith.constant 0 : index
    %21 = vector.load %arg3[%c3, %c0_13] : memref<9x128xf32, #tpu.memory_space<vmem>>, vector<1x128xf32>
    %22 = vector.broadcast %21 : vector<1x128xf32> to vector<8x128xf32>
    %23 = arith.mulf %20, %22 : vector<8x128xf32>
    %24 = arith.addf %18, %23 : vector<8x128xf32>
    %c0_14 = arith.constant 0 : index
    %c1_15 = arith.constant 1 : index
    %c8_16 = arith.constant 8 : index
    %25 = vector.load %arg2[%c0_14, %c1_15, %c8_16] : memref<1x10x144xf32, #tpu.memory_space<vmem>>, vector<1x8x128xf32>
    %26 = vector.shape_cast %25 : vector<1x8x128xf32> to vector<8x128xf32>
    %c4 = arith.constant 4 : index
    %c0_17 = arith.constant 0 : index
    %27 = vector.load %arg3[%c4, %c0_17] : memref<9x128xf32, #tpu.memory_space<vmem>>, vector<1x128xf32>
    %28 = vector.broadcast %27 : vector<1x128xf32> to vector<8x128xf32>
    %29 = arith.mulf %26, %28 : vector<8x128xf32>
    %30 = arith.addf %24, %29 : vector<8x128xf32>
    %c0_18 = arith.constant 0 : index
    %c1_19 = arith.constant 1 : index
    %c16_20 = arith.constant 16 : index
    %31 = vector.load %arg2[%c0_18, %c1_19, %c16_20] : memref<1x10x144xf32, #tpu.memory_space<vmem>>, vector<1x8x128xf32>
    %32 = vector.shape_cast %31 : vector<1x8x128xf32> to vector<8x128xf32>
    %c5 = arith.constant 5 : index
    %c0_21 = arith.constant 0 : index
    %33 = vector.load %arg3[%c5, %c0_21] : memref<9x128xf32, #tpu.memory_space<vmem>>, vector<1x128xf32>
    %34 = vector.broadcast %33 : vector<1x128xf32> to vector<8x128xf32>
    %35 = arith.mulf %32, %34 : vector<8x128xf32>
    %36 = arith.addf %30, %35 : vector<8x128xf32>
    %c0_22 = arith.constant 0 : index
    %c2_23 = arith.constant 2 : index
    %c0_24 = arith.constant 0 : index
    %37 = vector.load %arg2[%c0_22, %c2_23, %c0_24] : memref<1x10x144xf32, #tpu.memory_space<vmem>>, vector<1x8x128xf32>
    %38 = vector.shape_cast %37 : vector<1x8x128xf32> to vector<8x128xf32>
    %c6 = arith.constant 6 : index
    %c0_25 = arith.constant 0 : index
    %39 = vector.load %arg3[%c6, %c0_25] : memref<9x128xf32, #tpu.memory_space<vmem>>, vector<1x128xf32>
    %40 = vector.broadcast %39 : vector<1x128xf32> to vector<8x128xf32>
    %41 = arith.mulf %38, %40 : vector<8x128xf32>
    %42 = arith.addf %36, %41 : vector<8x128xf32>
    %c0_26 = arith.constant 0 : index
    %c2_27 = arith.constant 2 : index
    %c8_28 = arith.constant 8 : index
    %43 = vector.load %arg2[%c0_26, %c2_27, %c8_28] : memref<1x10x144xf32, #tpu.memory_space<vmem>>, vector<1x8x128xf32>
    %44 = vector.shape_cast %43 : vector<1x8x128xf32> to vector<8x128xf32>
    %c7 = arith.constant 7 : index
    %c0_29 = arith.constant 0 : index
    %45 = vector.load %arg3[%c7, %c0_29] : memref<9x128xf32, #tpu.memory_space<vmem>>, vector<1x128xf32>
    %46 = vector.broadcast %45 : vector<1x128xf32> to vector<8x128xf32>
    %47 = arith.mulf %44, %46 : vector<8x128xf32>
    %48 = arith.addf %42, %47 : vector<8x128xf32>
    %c0_30 = arith.constant 0 : index
    %c2_31 = arith.constant 2 : index
    %c16_32 = arith.constant 16 : index
    %49 = vector.load %arg2[%c0_30, %c2_31, %c16_32] : memref<1x10x144xf32, #tpu.memory_space<vmem>>, vector<1x8x128xf32>
    %50 = vector.shape_cast %49 : vector<1x8x128xf32> to vector<8x128xf32>
    %c8_33 = arith.constant 8 : index
    %c0_34 = arith.constant 0 : index
    %51 = vector.load %arg3[%c8_33, %c0_34] : memref<9x128xf32, #tpu.memory_space<vmem>>, vector<1x128xf32>
    %52 = vector.broadcast %51 : vector<1x128xf32> to vector<8x128xf32>
    %53 = arith.mulf %50, %52 : vector<8x128xf32>
    %54 = arith.addf %48, %53 : vector<8x128xf32>
    %c0_35 = arith.constant 0 : index
    %c0_36 = arith.constant 0 : index
    %c0_37 = arith.constant 0 : index
    %55 = vector.load %arg4[%c0_35, %c0_36, %c0_37] : memref<1x8x128xf32, #tpu.memory_space<vmem>>, vector<1x8x128xf32>
    %56 = vector.shape_cast %55 : vector<1x8x128xf32> to vector<8x128xf32>
    %57 = vector.shape_cast %54 : vector<8x128xf32> to vector<1x8x128xf32>
    tpu.vector_store %arg4[%c0_35, %c0_36, %c0_37], %57 {strides = array<i32>} : memref<1x8x128xf32, #tpu.memory_space<vmem>>, vector<1x8x128xf32>,
    return
  }
  func.func @transform_0(%arg0: i32, %arg1: i32) -> (i32, i32, i32) {
    %c2_i32 = arith.constant 2 : i32
    %0 = arith.muli %arg0, %c2_i32 : i32
    %1 = arith.addi %0, %arg1 : i32
    %c0_i32 = arith.constant 0 : i32
    %c0_i32_0 = arith.constant 0 : i32
    %c0_i32_1 = arith.constant 0 : i32
    return %1, %c0_i32, %c0_i32_0 : i32, i32, i32
  }
  func.func @transform_1(%arg0: i32, %arg1: i32) -> (i32, i32) {
    %c0_i32 = arith.constant 0 : i32
    %c0_i32_0 = arith.constant 0 : i32
    %c0_i32_1 = arith.constant 0 : i32
    return %c0_i32, %c0_i32_0 : i32, i32
  }
  func.func @transform_2(%arg0: i32, %arg1: i32) -> (i32, i32, i32) {
    %c0_i32 = arith.constant 0 : i32
    %c0_i32_0 = arith.constant 0 : i32
    return %arg0, %arg1, %c0_i32 : i32, i32, i32
  }
}

</mosaic_0001>

<llo_original>
// kernel: tpu_custom_call.1
$region0: #{tpu_custom_call.1}
  #allocation0 [shape = 'u32[]', space=smem, size = 0x4, offset = 0x4, fixed_abs, tag = 'smem constant byte address 0x4 - core index']
  #allocation1 [shape = 'u32[144,128]{1,0:T(1,128)}', space=vmem, size = 0x12000, scoped, tag = 'internal scratch']
  %s0 = inlined_call_operand.vmem [shape: f32[4,10,144], index: 0, kind: input, shape index: {}]
  %s1 = inlined_call_operand.vmem [shape: f32[9,128], index: 1, kind: input, shape index: {}]
  %s2 = inlined_call_operand.hbm [shape: f32[2,16,128], index: 2, kind: output, shape index: {}]
  %s3 = sld [smem:[#allocation0]]
  $region41: #{tpu_custom_call.1} parent=0
    _
  %s5 = ssub.s32 1, %s3
  %s6 = scalar_select 0, %s5, %s3
  $region1: #{tpu_custom_call.1} parent=0
    #allocation2 [shape = 'u8[8192]{0}', space=vmem, size = 0x2000, scoped, tag = 'output window, operand 0']
    #allocation3 [shape = 's32[2]{0}', space=sflag, size = 0x8, scoped, tag = 'scoped memory for tpu_custom_call.1']
    %7 = vsyncpa [#allocation3], 0
    %s8 = scalar_lea.sflag [#allocation3], 1
    %9 = vsyncpa %s8, 0
    loop: start=0, step=1, limit=6
    $region2: #{tpu_custom_call.1} parent=1 // loop_pre_header
      _
    $region3: #{tpu_custom_call.1} parent=1 // loop_header
      %s11 = sphi 0, %s15
      %p12 = scmp.ge.s32.totalorder %s11, 6
      %s18 = sphi 0, %s30
      %s19 = sphi 0, %s26
      %s20 = sphi 0, %s18
      %s21 = sphi 0, %s19
      %s22 = sphi 0, %s20
      %s23 = sphi 0, %s21
      %s37 = sphi 0, %s39
      %s40 = sphi 0, %s37
      %s41 = sphi 0, %s40
      %s57 = sphi 0, %s41
      %s61 = sphi 0, %s61
      %s63 = sphi 0, %s61
      %s64 = sphi 0, %s63
      %s78 = sphi 0, %s64
      %s86 = sphi 0, %s88
      %s89 = sphi 0, %s86
      %s90 = sphi 0, %s89
      %s106 = sphi 0, %s90
    $region4: #{tpu_custom_call.1} parent=1 // loop_header_branch
      %14 = sbr.rel (%p12) target = $region8
    $region5: #{tpu_custom_call.1} parent=1 // loop_body
      %s16 = ssub.s32 %s11, 1
      %s17 = ssub.s32 %s11, 2
      %s24 = sadd.s32 1, %s19
      %p25 = scmp.ge.s32.totalorder %s24, 2
      %s26 = scalar_select %p25, 0, %s24
      %s27 = sadd.s32 1, %s18
      %s28 = scalar_select %p25, %s27, %s18
      %p29 = scmp.ge.s32.totalorder %s28, 2
      %s30 = scalar_select %p29, 0, %s28
      %s31 = smul.u32 %s18, 2
      %s32 = sadd.s32 %s31, %s19
      %s33 = smul.u32 %s30, 2
      %s34 = sadd.s32 %s33, %s26
      %s35 = ssub.s32 %s32, %s34
      %p36 = scmp.eq.s32.totalorder %s35, 0
      %s38 = sadd.s32 %s37, 1
      %s39 = scalar_select %p36, %s37, %s38
      %p42 = pneg %p36
      %p43 = scmp.eq.s32.totalorder %s11, 3
      %p44 = por %p42, %p43
      %p45 = scmp.ne.s32.totalorder %s37, %s40
      %p46 = scmp.eq.s32.totalorder %s11, 0
      %p47 = por %p45, %p46
      %p48 = scmp.ne.s32.totalorder %s37, %s40
      %p49 = scmp.eq.s32.totalorder %s16, 3
      %p50 = por %p48, %p49
      %p51 = scmp.ne.s32.totalorder %s40, %s41
      %p52 = scmp.eq.s32.totalorder %s16, 0
      %p53 = por %p51, %p52
      %p54 = scmp.ne.s32.totalorder %s40, %s41
      %p55 = scmp.eq.s32.totalorder %s17, 3
      %p56 = por %p54, %p55
      %p58 = scmp.ne.s32.totalorder %s41, %s57
      %p59 = scmp.eq.s32.totalorder %s17, 0
      %p60 = por %p58, %p59
      %s62 = sadd.s32 %s61, 1
      %p65 = scmp.eq.s32.totalorder %s11, 3
      %p66 = scmp.ne.s32.totalorder %s61, %s63
      %p67 = scmp.eq.s32.totalorder %s11, 0
      %p68 = por %p66, %p67
      %p69 = scmp.ne.s32.totalorder %s61, %s63
      %p70 = scmp.eq.s32.totalorder %s16, 3
      %p71 = por %p69, %p70
      %p72 = scmp.ne.s32.totalorder %s63, %s64
      %p73 = scmp.eq.s32.totalorder %s16, 0
      %p74 = por %p72, %p73
      %p75 = scmp.ne.s32.totalorder %s63, %s64
      %p76 = scmp.eq.s32.totalorder %s17, 3
      %p77 = por %p75, %p76
      %p79 = scmp.ne.s32.totalorder %s64, %s78
      %p80 = scmp.eq.s32.totalorder %s17, 0
      %p81 = por %p79, %p80
      %s82 = ssub.s32 %s18, %s30
      %s83 = ssub.s32 %s19, %s26
      %s84 = sor.u32 %s82, %s83
      %p85 = scmp.eq.s32.totalorder %s84, 0
      %s87 = sadd.s32 %s86, 1
      %s88 = scalar_select %p85, %s86, %s87
      %p91 = pneg %p85
      %p92 = scmp.eq.s32.totalorder %s11, 3
      %p93 = por %p91, %p92
      %p94 = scmp.ne.s32.totalorder %s86, %s89
      %p95 = scmp.eq.s32.totalorder %s11, 0
      %p96 = por %p94, %p95
      %p97 = scmp.ne.s32.totalorder %s86, %s89
      %p98 = scmp.eq.s32.totalorder %s16, 3
      %p99 = por %p97, %p98
      %p100 = scmp.ne.s32.totalorder %s89, %s90
      %p101 = scmp.eq.s32.totalorder %s16, 0
      %p102 = por %p100, %p101
      %p103 = scmp.ne.s32.totalorder %s89, %s90
      %p104 = scmp.eq.s32.totalorder %s17, 3
      %p105 = por %p103, %p104
      %p107 = scmp.ne.s32.totalorder %s90, %s106
      %p108 = scmp.eq.s32.totalorder %s17, 0
      %p109 = por %p107, %p108
      %p110 = scmp.le.s32.totalorder 1, %s11
      %p111 = scmp.lt.s32.totalorder %s11, 5
      %p112 = pnand %p110, %p111
      %p113 = pneg %p112
      // Predicated region
      $region9: #{tpu_custom_call.1} parent=5 // pred_check
        _
      $region10: #{tpu_custom_call.1} parent=5 // pred_check_branch
        %115 = sbr.rel (%p112) target = $region12
      $region11: #{tpu_custom_call.1} parent=5 // pred_region
        %s116 = ssub.s32 %s11, 1
        // Predicated region
        $region13: #{tpu_custom_call.1} parent=11 // pred_check
          %p117 = pneg %p74
        $region14: #{tpu_custom_call.1} parent=11 // pred_check_branch
          %119 = sbr.rel (%p117) target = $region16
        $region15: #{tpu_custom_call.1} parent=11 // pred_region
          _
        $region16: #{tpu_custom_call.1} parent=11 // pred_fallthru
          _
      $region12: #{tpu_custom_call.1} parent=5 // pred_fallthru
        _
      %p120 = scmp.lt.s32.totalorder %s11, 4
      // Predicated region
      $region17: #{tpu_custom_call.1} parent=5 // pred_check
        %p121 = pneg %p120
      $region18: #{tpu_custom_call.1} parent=5 // pred_check_branch
        %123 = sbr.rel (%p121) target = $region20
      $region19: #{tpu_custom_call.1} parent=5 // pred_region
        // Predicated region
        $region21: #{tpu_custom_call.1} parent=19 // pred_check
          %p124 = pneg %p47
        $region22: #{tpu_custom_call.1} parent=19 // pred_check_branch
          %126 = sbr.rel (%p124) target = $region24
        $region23: #{tpu_custom_call.1} parent=19 // pred_region
          %s127 = smul.u32 %s18, 2
          %s128 = sadd.s32 %s127, %s19
          %p129 = scmp.lt.s32.totalorder %s128, 3
          %s130 = scalar_select %p129, %s128, 3
          %s131 = smul.addr %s130, 4
          %s132 = smul.addr %s131, 8
          %s133 = scalar_lea.vmem %s0, %s132
          %s134 = smul.u32 %s18, 2
          %s135 = sadd.s32 %s134, %s19
        $region24: #{tpu_custom_call.1} parent=19 // pred_fallthru
          _
      $region20: #{tpu_custom_call.1} parent=5 // pred_fallthru
        _
      %p136 = scmp.le.s32.totalorder 1, %s11
      %p137 = scmp.lt.s32.totalorder %s11, 5
      %p138 = pnand %p136, %p137
      %p139 = pneg %p138
      // Predicated region
      $region25: #{tpu_custom_call.1} parent=5 // pred_check
        _
      $region26: #{tpu_custom_call.1} parent=5 // pred_check_branch
        %141 = sbr.rel (%p138) target = $region28
      $region27: #{tpu_custom_call.1} parent=5 // pred_region
        %s142 = ssub.s32 %s11, 1
        %s143 = smul.u32 %s20, 2
        %s144 = sadd.s32 %s143, %s21
        %p145 = scmp.lt.s32.totalorder %s144, 3
        %s146 = scalar_select %p145, %s144, 3
        %s147 = smul.addr %s146, 4
        %s148 = smul.addr %s147, 8
        %s149 = scalar_lea.vmem %s0, %s148
        %p150 = pneg %p53
        %p151 = pneg %p50
        %p152 = pneg %p74
        %p153 = pneg %p71
        %p154 = pneg %p102
        %p155 = pneg %p99
        %s156 = sand.u32 %s89, 1
        %s157 = scalar_lea.sflag [#allocation3], %s156
        %s158 = sand.u32 %s89, 1
        %s159 = smul.addr %s158, 8
        %s160 = scalar_lea.vmem [#allocation2], %s159
        %s161 = smul.u32 %s20, 2
        %s162 = sadd.s32 %s161, %s21
        %p163 = scmp.lt.s32.totalorder %s162, 3
        %s164 = scalar_select %p163, %s162, 3
        %s165 = smul.addr %s164, 4
        %s166 = smul.addr %s165, 8
        %s167 = scalar_lea.vmem %s0, %s166
        %s168 = smul.u32 %s20, 2
        %s169 = sadd.s32 %s168, %s21
        %v170 = vld [vmem:[%s167] sm:$0xff]
        %v171 = vld [vmem:[%s1] sm:$0x1]
        %v172 = vlaneseq
        %v173 = vshrl.u32 %v172, 7
        %v174 = vsub.s32 0, %v173
        %v175 = vrot.slane %v171, %v174
        %v176 = vmul.f32 %v170, %v175
        %v177 = vadd.f32 %v176, 0.0
        %v178 = vld [vmem:[%s167 + $0x8] sm:$0xff]
        %v179 = vld [vmem:[%s1 + $0x1] sm:$0x1]
        %v180 = vlaneseq
        %v181 = vshrl.u32 %v180, 7
        %v182 = vsub.s32 0, %v181
        %v183 = vrot.slane %v179, %v182
        %185 = vrot.lane.b32.xlu0 %v183, 8
        %v186 = vpop.permute.xlu0 %185
        %v188 = vmul.f32 %v170, %v186
        %v189 = vmul.f32 %v178, %v186
        %192 = vrot.lane.b32.xlu0 %v188, 120
        %v193 = vpop.permute.xlu0 %192
        %194 = vrot.lane.b32.xlu0 %v189, 120
        %v195 = vpop.permute.xlu0 %194
        %vm196 = vcmask 982016
        %v197 = vsel %vm196, %v193, %v195
        %v199 = vadd.f32 %v177, %v197
        %v200 = vld [vmem:[%s1 + $0x2] sm:$0x1]
        %v201 = vlaneseq
        %v202 = vshrl.u32 %v201, 7
        %v203 = vsub.s32 0, %v202
        %v204 = vrot.slane %v200, %v203
        %206 = vrot.lane.b32.xlu0 %v204, 16
        %v207 = vpop.permute.xlu0 %206
        %v209 = vmul.f32 %v170, %v207
        %v210 = vmul.f32 %v178, %v207
        %213 = vrot.lane.b32.xlu0 %v209, 112
        %v214 = vpop.permute.xlu0 %213
        %215 = vrot.lane.b32.xlu0 %v210, 112
        %v216 = vpop.permute.xlu0 %215
        %vm217 = vcmask 916480
        %v218 = vsel %vm217, %v214, %v216
        %v220 = vadd.f32 %v199, %v218
        %v221 = vld [vmem:[%s167] sm:$0xfe]
        %v222 = vld [vmem:[%s167 + $0x10] sm:$0x1]
        %v223 = vld [vmem:[%s1 + $0x3] sm:$0x1]
        %v224 = vlaneseq
        %v225 = vshrl.u32 %v224, 7
        %v226 = vsub.s32 0, %v225
        %v227 = vrot.slane %v223, %v226
        %v228 = vmul.f32 %v221, %v227
        %v229 = vmul.f32 %v222, %v227
        %vm232 = vcmask 1046528
        %v233 = vrot.slane %v228, 1
        %v234 = vrot.slane %v229, 1
        %v235 = vsel %vm232, %v233, %v234
        %v237 = vadd.f32 %v220, %v235
        %v238 = vld [vmem:[%s167 + $0x8] sm:$0xfe]
        %v239 = vld [vmem:[%s167 + $0x18] sm:$0x1]
        %v240 = vld [vmem:[%s1 + $0x4] sm:$0x1]
        %v241 = vlaneseq
        %v242 = vshrl.u32 %v241, 7
        %v243 = vsub.s32 0, %v242
        %v244 = vrot.slane %v240, %v243
        %246 = vrot.lane.b32.xlu0 %v244, 8
        %v247 = vpop.permute.xlu0 %246
        %v249 = vmul.f32 %v221, %v247
        %v250 = vmul.f32 %v238, %v247
        %v251 = vmul.f32 %v222, %v247
        %v252 = vmul.f32 %v239, %v247
        %v257 = vrot.slane %v249, 1
        %v258 = vrot.slane %v251, 1
        %v259 = vsel %vm232, %v257, %v258
        %v260 = vrot.slane %v250, 1
        %v261 = vrot.slane %v252, 1
        %v262 = vsel %vm232, %v260, %v261
        %263 = vrot.lane.b32.xlu0 %v259, 120
        %v264 = vpop.permute.xlu0 %263
        %265 = vrot.lane.b32.xlu0 %v262, 120
        %v266 = vpop.permute.xlu0 %265
        %v267 = vsel %vm196, %v264, %v266
        %v269 = vadd.f32 %v237, %v267
        %v270 = vld [vmem:[%s1 + $0x5] sm:$0x1]
        %v271 = vlaneseq
        %v272 = vshrl.u32 %v271, 7
        %v273 = vsub.s32 0, %v272
        %v274 = vrot.slane %v270, %v273
        %276 = vrot.lane.b32.xlu0 %v274, 16
        %v277 = vpop.permute.xlu0 %276
        %v279 = vmul.f32 %v221, %v277
        %v280 = vmul.f32 %v238, %v277
        %v281 = vmul.f32 %v222, %v277
        %v282 = vmul.f32 %v239, %v277
        %v287 = vrot.slane %v279, 1
        %v288 = vrot.slane %v281, 1
        %v289 = vsel %vm232, %v287, %v288
        %v290 = vrot.slane %v280, 1
        %v291 = vrot.slane %v282, 1
        %v292 = vsel %vm232, %v290, %v291
        %293 = vrot.lane.b32.xlu0 %v289, 112
        %v294 = vpop.permute.xlu0 %293
        %295 = vrot.lane.b32.xlu0 %v292, 112
        %v296 = vpop.permute.xlu0 %295
        %v297 = vsel %vm217, %v294, %v296
        %v299 = vadd.f32 %v269, %v297
        %v300 = vld [vmem:[%s167] sm:$0xfc]
        %v301 = vld [vmem:[%s167 + $0x10] sm:$0x3]
        %v302 = vld [vmem:[%s1 + $0x6] sm:$0x1]
        %v303 = vlaneseq
        %v304 = vshrl.u32 %v303, 7
        %v305 = vsub.s32 0, %v304
        %v306 = vrot.slane %v302, %v305
        %v307 = vmul.f32 %v300, %v306
        %v308 = vmul.f32 %v301, %v306
        %vm311 = vcmask 1045504
        %v312 = vrot.slane %v307, 2
        %v313 = vrot.slane %v308, 2
        %v314 = vsel %vm311, %v312, %v313
        %v316 = vadd.f32 %v299, %v314
        %v317 = vld [vmem:[%s167 + $0x8] sm:$0xfc]
        %v318 = vld [vmem:[%s167 + $0x18] sm:$0x3]
        %v319 = vld [vmem:[%s1 + $0x7] sm:$0x1]
        %v320 = vlaneseq
        %v321 = vshrl.u32 %v320, 7
        %v322 = vsub.s32 0, %v321
        %v323 = vrot.slane %v319, %v322
        %325 = vrot.lane.b32.xlu0 %v323, 8
        %v326 = vpop.permute.xlu0 %325
        %v328 = vmul.f32 %v300, %v326
        %v329 = vmul.f32 %v317, %v326
        %v330 = vmul.f32 %v301, %v326
        %v331 = vmul.f32 %v318, %v326
        %v336 = vrot.slane %v328, 2
        %v337 = vrot.slane %v330, 2
        %v338 = vsel %vm311, %v336, %v337
        %v339 = vrot.slane %v329, 2
        %v340 = vrot.slane %v331, 2
        %v341 = vsel %vm311, %v339, %v340
        %342 = vrot.lane.b32.xlu0 %v338, 120
        %v343 = vpop.permute.xlu0 %342
        %344 = vrot.lane.b32.xlu0 %v341, 120
        %v345 = vpop.permute.xlu0 %344
        %v346 = vsel %vm196, %v343, %v345
        %v348 = vadd.f32 %v316, %v346
        %v349 = vld [vmem:[%s1 + $0x8] sm:$0x1]
        %v350 = vlaneseq
        %v351 = vshrl.u32 %v350, 7
        %v352 = vsub.s32 0, %v351
        %v353 = vrot.slane %v349, %v352
        %355 = vrot.lane.b32.xlu0 %v353, 16
        %v356 = vpop.permute.xlu0 %355
        %v358 = vmul.f32 %v300, %v356
        %v359 = vmul.f32 %v317, %v356
        %v360 = vmul.f32 %v301, %v356
        %v361 = vmul.f32 %v318, %v356
        %v366 = vrot.slane %v358, 2
        %v367 = vrot.slane %v360, 2
        %v368 = vsel %vm311, %v366, %v367
        %v369 = vrot.slane %v359, 2
        %v370 = vrot.slane %v361, 2
        %v371 = vsel %vm311, %v369, %v370
        %372 = vrot.lane.b32.xlu0 %v368, 112
        %v373 = vpop.permute.xlu0 %372
        %374 = vrot.lane.b32.xlu0 %v371, 112
        %v375 = vpop.permute.xlu0 %374
        %v376 = vsel %vm217, %v373, %v375
        %v378 = vadd.f32 %v348, %v376
        %379 = vst [vmem:[%s160] sm:$0xff] %v378
        %s380 = sand.u32 %s89, 1
        %s381 = scalar_lea.sflag [#allocation3], %s380
        %s382 = sand.u32 %s89, 1
        %s383 = smul.addr %s382, 8
        %s384 = scalar_lea.vmem [#allocation2], %s383
        // Predicated region
        $region29: #{tpu_custom_call.1} parent=27 // pred_check
          %p385 = pneg %p99
        $region30: #{tpu_custom_call.1} parent=27 // pred_check_branch
          %387 = sbr.rel (%p385) target = $region32
        $region31: #{tpu_custom_call.1} parent=27 // pred_region
          %s389 = ssub.s32 128, 128
          %390 = vsyncadd %s381, %s389
          %s391 = smul.addr %s20, 2
          %s392 = sadd.s32 %s21, %s391
          %s393 = smul.addr %s392, 128
          %s394 = scalar_lea.hbm %s2, %s393
          %s396 = sshll.u32 %s384, 4
          %s397 = int_to_ptr.vmem [resolvable:$true] %s396
          %399 = dma.vmem_to_hbm [thread:$0]  %s397, 128, %s394, %s381
        $region32: #{tpu_custom_call.1} parent=27 // pred_fallthru
          _
      $region28: #{tpu_custom_call.1} parent=5 // pred_fallthru
        _
      %p400 = scmp.le.s32.totalorder 2, %s11
      // Predicated region
      $region33: #{tpu_custom_call.1} parent=5 // pred_check
        %p401 = pneg %p400
      $region34: #{tpu_custom_call.1} parent=5 // pred_check_branch
        %403 = sbr.rel (%p401) target = $region36
      $region35: #{tpu_custom_call.1} parent=5 // pred_region
        %s404 = ssub.s32 %s11, 2
        // Predicated region
        $region37: #{tpu_custom_call.1} parent=35 // pred_check
          %p405 = pneg %p105
        $region38: #{tpu_custom_call.1} parent=35 // pred_check_branch
          %407 = sbr.rel (%p405) target = $region40
        $region39: #{tpu_custom_call.1} parent=35 // pred_region
          %s408 = sand.u32 %s90, 1
          %s409 = scalar_lea.sflag [#allocation3], %s408
          %s410 = sand.u32 %s90, 1
          %s411 = smul.addr %s410, 8
          %s412 = scalar_lea.vmem [#allocation2], %s411
          %413 = dma.done %s409, 128
        $region40: #{tpu_custom_call.1} parent=35 // pred_fallthru
          _
      $region36: #{tpu_custom_call.1} parent=5 // pred_fallthru
        _
    $region6: #{tpu_custom_call.1} parent=1 // loop_footer
      %s15 = sadd.s32 1, %s11
    $region7: #{tpu_custom_call.1} parent=1 // loop_footer_branch
      %10 = sbr.rel target = $region3
    $region8: #{tpu_custom_call.1} parent=1 // loop_exit
      _
    %414 = vsyncpa [#allocation3], 1
    %s415 = scalar_lea.sflag [#allocation3], 1
    %416 = vsyncpa %s415, 1

</llo_original>
